<compile_context>
chip_gen: v6e
topology: v6e:2x2x1
jax: 0.10.0
libtpu: 0.0.40
codegen_flags: <defaults>
</compile_context>

<pallas_src>
import jax
import jax.numpy as jnp
from jax.experimental import pallas as pl
from jax.experimental.pallas import tpu as pltpu


def _round_up(x, m):
    return ((x + m - 1) // m) * m


def drebin_mlp_kernel(x_ref,
                      w1_ref, b1_ref,
                      w2_ref, b2_ref,
                      w3_ref, b3_ref,
                      w4_ref, b4_ref,
                      w5_ref, b5_ref,
                      o_ref):
    # One batch tile per grid step; all (bf16) weights stay resident in VMEM.
    # Matmuls run on the MXU in bf16 with f32 accumulation; bias add + tanh
    # are done in f32.
    def layer(h, w_ref, b_ref):
        return jnp.dot(h.astype(jnp.bfloat16), w_ref[...],
                       preferred_element_type=jnp.float32) + b_ref[...]

    h = jnp.tanh(layer(x_ref[...], w1_ref, b1_ref))
    h = jnp.tanh(layer(h, w2_ref, b2_ref))
    h = jnp.tanh(layer(h, w3_ref, b3_ref))
    h = jnp.tanh(layer(h, w4_ref, b4_ref))
    o_ref[...] = layer(h, w5_ref, b5_ref).astype(o_ref.dtype)


def drebin_net4_forward(x, params, *, batch_tile=128):
    """Fused DrebinNet4 forward.

    x:      [B, input_size] float32
    params: list of (W [in, out] float32, b [out] float32), one per layer
            (W is transposed vs. PyTorch's nn.Linear [out, in]).
    Returns [B, n_classes] float32 (fc5 logits, no final activation).
    """
    B, in_dim = x.shape
    out_dim = params[-1][0].shape[1]

    # Lane-dense padded feature dims (multiples of 128).
    in_pad = _round_up(in_dim, 128)

    # Batch tiling: sublane-aligned.  Small batches -> one grid step; large
    # batches stream over a "parallel" grid axis with resident weights.
    if B >= batch_tile:
        tb = batch_tile
        b_pad = _round_up(B, tb)
    else:
        tb = _round_up(B, 8)
        b_pad = tb

    x_pad = jnp.zeros((b_pad, in_pad), jnp.float32).at[:B, :in_dim].set(x)

    flat_params = []
    in_specs = [pl.BlockSpec((tb, in_pad), lambda i: (i, 0))]
    prev_pad = in_pad
    for (w, b) in params:
        k, n = w.shape
        n_pad = _round_up(n, 128)
        w_padded = jnp.zeros((prev_pad, n_pad), jnp.bfloat16).at[:k, :n].set(
            w.astype(jnp.bfloat16))
        b_padded = jnp.zeros((1, n_pad), jnp.float32).at[0, :n].set(b)
        flat_params.extend([w_padded, b_padded])
        # Full-array blocks with constant block index -> weights stay resident
        # in VMEM across all batch tiles (no re-DMA per grid step).
        in_specs.append(pl.BlockSpec((prev_pad, n_pad), lambda i: (0, 0)))
        in_specs.append(pl.BlockSpec((1, n_pad), lambda i: (0, 0)))
        prev_pad = n_pad

    out_pad = prev_pad  # padded width of the final layer (lane-dense output)

    out = pl.pallas_call(
        drebin_mlp_kernel,
        out_shape=jax.ShapeDtypeStruct((b_pad, out_pad), jnp.float32),
        grid=(b_pad // tb,),
        in_specs=in_specs,
        out_specs=pl.BlockSpec((tb, out_pad), lambda i: (i, 0)),
        compiler_params=pltpu.CompilerParams(
            dimension_semantics=("parallel",)),
    )(x_pad, *flat_params)

    # Strip batch / lane padding (free wrapper-side layout plumbing).
    return out[:B, :out_dim]


def init_linear(key, in_features, out_features):
    """Deterministic init mimicking nn.Linear's uniform(-1/sqrt(fan_in), +)."""
    kw, kb = jax.random.split(key)
    bound = 1.0 / jnp.sqrt(jnp.float32(in_features))
    # Stored as [in, out] (transposed vs. PyTorch) so the kernel does x @ W.
    w = jax.random.uniform(kw, (in_features, out_features), jnp.float32, -bound, bound)
    b = jax.random.uniform(kb, (out_features,), jnp.float32, -bound, bound)
    return w, b


def reference_forward_f32(x, params):
    h = x
    for i, (w, b) in enumerate(params):
        h = h @ w + b[None, :]
        if i < len(params) - 1:
            h = jnp.tanh(h)
    return h


def reference_forward_bf16(x, params):
    # Matches the kernel's dtype choices: bf16 dot operands, f32 accumulate,
    # f32 bias add / tanh.
    h = x
    for i, (w, b) in enumerate(params):
        h = jnp.dot(h.astype(jnp.bfloat16), w.astype(jnp.bfloat16),
                    preferred_element_type=jnp.float32) + b[None, :]
        if i < len(params) - 1:
            h = jnp.tanh(h)
    return h


if __name__ == "__main__":
    input_size = 991
    fc1 = fc2 = fc3 = fc4 = 100
    n_classes = 2
    batch = 2

    key = jax.random.PRNGKey(0)
    keys = jax.random.split(key, 6)

    params = [
        init_linear(keys[0], input_size, fc1),
        init_linear(keys[1], fc1, fc2),
        init_linear(keys[2], fc2, fc3),
        init_linear(keys[3], fc3, fc4),
        init_linear(keys[4], fc4, n_classes),
    ]

    x = jax.random.normal(keys[5], (batch, input_size), jnp.float32)

    out = jax.block_until_ready(drebin_net4_forward(x, params))

    ref16 = reference_forward_bf16(x, params)   # same dtype recipe as kernel
    ref32 = reference_forward_f32(x, params)    # full-f32 PyTorch semantics

    assert out.shape == (batch, n_classes)
    assert jnp.allclose(out, ref16, atol=2e-3, rtol=2e-3), (
        f"max |diff| vs bf16-matched ref: {jnp.max(jnp.abs(out - ref16))}")
    assert jnp.allclose(out, ref32, atol=5e-2, rtol=5e-2), (
        f"max |diff| vs f32 ref: {jnp.max(jnp.abs(out - ref32))}")

    print("KERNEL_OK")
</pallas_src>

<mosaic_0001>
module attributes {stable_mosaic.version = 11 : i64} {
  func.func @drebin_mlp_kernel(%arg0: i32, %arg1: memref<8x1024xf32, #tpu.memory_space<vmem>>, %arg2: memref<1024x128xbf16, #tpu.memory_space<vmem>>, %arg3: memref<1x128xf32, #tpu.memory_space<vmem>>, %arg4: memref<128x128xbf16, #tpu.memory_space<vmem>>, %arg5: memref<1x128xf32, #tpu.memory_space<vmem>>, %arg6: memref<128x128xbf16, #tpu.memory_space<vmem>>, %arg7: memref<1x128xf32, #tpu.memory_space<vmem>>, %arg8: memref<128x128xbf16, #tpu.memory_space<vmem>>, %arg9: memref<1x128xf32, #tpu.memory_space<vmem>>, %arg10: memref<128x128xbf16, #tpu.memory_space<vmem>>, %arg11: memref<1x128xf32, #tpu.memory_space<vmem>>, %arg12: memref<8x128xf32, #tpu.memory_space<vmem>>) attributes {dimension_semantics = [#tpu.dimension_semantics<parallel>], iteration_bounds = array<i64: 1>, scalar_prefetch = 0 : i64, scratch_operands = 0 : i64, tpu.core_type = #tpu.core_type<tc>, window_params = [{transform_indices = @transform_0, window_bounds = array<i64: 8, 1024>}, {pipeline_mode = #tpu.pipeline_mode<synchronous>, transform_indices = @transform_1, window_bounds = array<i64: 1024, 128>}, {pipeline_mode = #tpu.pipeline_mode<synchronous>, transform_indices = @transform_2, window_bounds = array<i64: 1, 128>}, {pipeline_mode = #tpu.pipeline_mode<synchronous>, transform_indices = @transform_3, window_bounds = array<i64: 128, 128>}, {pipeline_mode = #tpu.pipeline_mode<synchronous>, transform_indices = @transform_4, window_bounds = array<i64: 1, 128>}, {pipeline_mode = #tpu.pipeline_mode<synchronous>, transform_indices = @transform_5, window_bounds = array<i64: 128, 128>}, {pipeline_mode = #tpu.pipeline_mode<synchronous>, transform_indices = @transform_6, window_bounds = array<i64: 1, 128>}, {pipeline_mode = #tpu.pipeline_mode<synchronous>, transform_indices = @transform_7, window_bounds = array<i64: 128, 128>}, {pipeline_mode = #tpu.pipeline_mode<synchronous>, transform_indices = @transform_8, window_bounds = array<i64: 1, 128>}, {pipeline_mode = #tpu.pipeline_mode<synchronous>, transform_indices = @transform_9, window_bounds = array<i64: 128, 128>}, {pipeline_mode = #tpu.pipeline_mode<synchronous>, transform_indices = @transform_10, window_bounds = array<i64: 1, 128>}, {transform_indices = @transform_11, window_bounds = array<i64: 8, 128>}]} {
    %c0 = arith.constant 0 : index
    %c0_0 = arith.constant 0 : index
    %0 = vector.load %arg1[%c0, %c0_0] : memref<8x1024xf32, #tpu.memory_space<vmem>>, vector<8x1024xf32>
    %1 = arith.truncf %0 : vector<8x1024xf32> to vector<8x1024xbf16>
    %c0_1 = arith.constant 0 : index
    %c0_2 = arith.constant 0 : index
    %2 = vector.load %arg2[%c0_1, %c0_2] : memref<1024x128xbf16, #tpu.memory_space<vmem>>, vector<1024x128xbf16>
    %cst = arith.constant dense<0.000000e+00> : vector<8x128xf32>
    %3 = tpu.matmul %1, %2, %cst {dimension_numbers = #tpu.dot_dimension_numbers<[1], [0], [0], [1], [0, 0, 1, 1], [], []>} : vector<8x1024xbf16>, vector<1024x128xbf16>, vector<8x128xf32> -> vector<8x128xf32>
    %c0_3 = arith.constant 0 : index
    %c0_4 = arith.constant 0 : index
    %4 = vector.load %arg3[%c0_3, %c0_4] : memref<1x128xf32, #tpu.memory_space<vmem>>, vector<1x128xf32>
    %5 = vector.broadcast %4 : vector<1x128xf32> to vector<8x128xf32>
    %6 = arith.addf %3, %5 : vector<8x128xf32>
    %7 = math.tanh %6 : vector<8x128xf32>
    %8 = arith.truncf %7 : vector<8x128xf32> to vector<8x128xbf16>
    %c0_5 = arith.constant 0 : index
    %c0_6 = arith.constant 0 : index
    %9 = vector.load %arg4[%c0_5, %c0_6] : memref<128x128xbf16, #tpu.memory_space<vmem>>, vector<128x128xbf16>
    %cst_7 = arith.constant dense<0.000000e+00> : vector<8x128xf32>
    %10 = tpu.matmul %8, %9, %cst_7 {dimension_numbers = #tpu.dot_dimension_numbers<[1], [0], [0], [1], [0, 0, 1, 1], [], []>} : vector<8x128xbf16>, vector<128x128xbf16>, vector<8x128xf32> -> vector<8x128xf32>
    %c0_8 = arith.constant 0 : index
    %c0_9 = arith.constant 0 : index
    %11 = vector.load %arg5[%c0_8, %c0_9] : memref<1x128xf32, #tpu.memory_space<vmem>>, vector<1x128xf32>
    %12 = vector.broadcast %11 : vector<1x128xf32> to vector<8x128xf32>
    %13 = arith.addf %10, %12 : vector<8x128xf32>
    %14 = math.tanh %13 : vector<8x128xf32>
    %15 = arith.truncf %14 : vector<8x128xf32> to vector<8x128xbf16>
    %c0_10 = arith.constant 0 : index
    %c0_11 = arith.constant 0 : index
    %16 = vector.load %arg6[%c0_10, %c0_11] : memref<128x128xbf16, #tpu.memory_space<vmem>>, vector<128x128xbf16>
    %cst_12 = arith.constant dense<0.000000e+00> : vector<8x128xf32>
    %17 = tpu.matmul %15, %16, %cst_12 {dimension_numbers = #tpu.dot_dimension_numbers<[1], [0], [0], [1], [0, 0, 1, 1], [], []>} : vector<8x128xbf16>, vector<128x128xbf16>, vector<8x128xf32> -> vector<8x128xf32>
    %c0_13 = arith.constant 0 : index
    %c0_14 = arith.constant 0 : index
    %18 = vector.load %arg7[%c0_13, %c0_14] : memref<1x128xf32, #tpu.memory_space<vmem>>, vector<1x128xf32>
    %19 = vector.broadcast %18 : vector<1x128xf32> to vector<8x128xf32>
    %20 = arith.addf %17, %19 : vector<8x128xf32>
    %21 = math.tanh %20 : vector<8x128xf32>
    %22 = arith.truncf %21 : vector<8x128xf32> to vector<8x128xbf16>
    %c0_15 = arith.constant 0 : index
    %c0_16 = arith.constant 0 : index
    %23 = vector.load %arg8[%c0_15, %c0_16] : memref<128x128xbf16, #tpu.memory_space<vmem>>, vector<128x128xbf16>
    %cst_17 = arith.constant dense<0.000000e+00> : vector<8x128xf32>
    %24 = tpu.matmul %22, %23, %cst_17 {dimension_numbers = #tpu.dot_dimension_numbers<[1], [0], [0], [1], [0, 0, 1, 1], [], []>} : vector<8x128xbf16>, vector<128x128xbf16>, vector<8x128xf32> -> vector<8x128xf32>
    %c0_18 = arith.constant 0 : index
    %c0_19 = arith.constant 0 : index
    %25 = vector.load %arg9[%c0_18, %c0_19] : memref<1x128xf32, #tpu.memory_space<vmem>>, vector<1x128xf32>
    %26 = vector.broadcast %25 : vector<1x128xf32> to vector<8x128xf32>
    %27 = arith.addf %24, %26 : vector<8x128xf32>
    %28 = math.tanh %27 : vector<8x128xf32>
    %29 = arith.truncf %28 : vector<8x128xf32> to vector<8x128xbf16>
    %c0_20 = arith.constant 0 : index
    %c0_21 = arith.constant 0 : index
    %30 = vector.load %arg10[%c0_20, %c0_21] : memref<128x128xbf16, #tpu.memory_space<vmem>>, vector<128x128xbf16>
    %cst_22 = arith.constant dense<0.000000e+00> : vector<8x128xf32>
    %31 = tpu.matmul %29, %30, %cst_22 {dimension_numbers = #tpu.dot_dimension_numbers<[1], [0], [0], [1], [0, 0, 1, 1], [], []>} : vector<8x128xbf16>, vector<128x128xbf16>, vector<8x128xf32> -> vector<8x128xf32>
    %c0_23 = arith.constant 0 : index
    %c0_24 = arith.constant 0 : index
    %32 = vector.load %arg11[%c0_23, %c0_24] : memref<1x128xf32, #tpu.memory_space<vmem>>, vector<1x128xf32>
    %33 = vector.broadcast %32 : vector<1x128xf32> to vector<8x128xf32>
    %34 = arith.addf %31, %33 : vector<8x128xf32>
    %c0_25 = arith.constant 0 : index
    %c0_26 = arith.constant 0 : index
    %35 = vector.load %arg12[%c0_25, %c0_26] : memref<8x128xf32, #tpu.memory_space<vmem>>, vector<8x128xf32>
    tpu.vector_store %arg12[%c0_25, %c0_26], %34 {strides = array<i32>} : memref<8x128xf32, #tpu.memory_space<vmem>>, vector<8x128xf32>,
    return
  }
  func.func @transform_0(%arg0: i32) -> (i32, i32) {
    %c0_i32 = arith.constant 0 : i32
    %c0_i32_0 = arith.constant 0 : i32
    return %arg0, %c0_i32 : i32, i32
  }
  func.func @transform_1(%arg0: i32) -> (i32, i32) {
    %c0_i32 = arith.constant 0 : i32
    %c0_i32_0 = arith.constant 0 : i32
    %c0_i32_1 = arith.constant 0 : i32
    return %c0_i32, %c0_i32_0 : i32, i32
  }
  func.func @transform_2(%arg0: i32) -> (i32, i32) {
    %c0_i32 = arith.constant 0 : i32
    %c0_i32_0 = arith.constant 0 : i32
    %c0_i32_1 = arith.constant 0 : i32
    return %c0_i32, %c0_i32_0 : i32, i32
  }
  func.func @transform_3(%arg0: i32) -> (i32, i32) {
    %c0_i32 = arith.constant 0 : i32
    %c0_i32_0 = arith.constant 0 : i32
    %c0_i32_1 = arith.constant 0 : i32
    return %c0_i32, %c0_i32_0 : i32, i32
  }
  func.func @transform_4(%arg0: i32) -> (i32, i32) {
    %c0_i32 = arith.constant 0 : i32
    %c0_i32_0 = arith.constant 0 : i32
    %c0_i32_1 = arith.constant 0 : i32
    return %c0_i32, %c0_i32_0 : i32, i32
  }
  func.func @transform_5(%arg0: i32) -> (i32, i32) {
    %c0_i32 = arith.constant 0 : i32
    %c0_i32_0 = arith.constant 0 : i32
    %c0_i32_1 = arith.constant 0 : i32
    return %c0_i32, %c0_i32_0 : i32, i32
  }
  func.func @transform_6(%arg0: i32) -> (i32, i32) {
    %c0_i32 = arith.constant 0 : i32
    %c0_i32_0 = arith.constant 0 : i32
    %c0_i32_1 = arith.constant 0 : i32
    return %c0_i32, %c0_i32_0 : i32, i32
  }
  func.func @transform_7(%arg0: i32) -> (i32, i32) {
    %c0_i32 = arith.constant 0 : i32
    %c0_i32_0 = arith.constant 0 : i32
    %c0_i32_1 = arith.constant 0 : i32
    return %c0_i32, %c0_i32_0 : i32, i32
  }
  func.func @transform_8(%arg0: i32) -> (i32, i32) {
    %c0_i32 = arith.constant 0 : i32
    %c0_i32_0 = arith.constant 0 : i32
    %c0_i32_1 = arith.constant 0 : i32
    return %c0_i32, %c0_i32_0 : i32, i32
  }
  func.func @transform_9(%arg0: i32) -> (i32, i32) {
    %c0_i32 = arith.constant 0 : i32
    %c0_i32_0 = arith.constant 0 : i32
    %c0_i32_1 = arith.constant 0 : i32
    return %c0_i32, %c0_i32_0 : i32, i32
  }
  func.func @transform_10(%arg0: i32) -> (i32, i32) {
    %c0_i32 = arith.constant 0 : i32
    %c0_i32_0 = arith.constant 0 : i32
    %c0_i32_1 = arith.constant 0 : i32
    return %c0_i32, %c0_i32_0 : i32, i32
  }
  func.func @transform_11(%arg0: i32) -> (i32, i32) {
    %c0_i32 = arith.constant 0 : i32
    %c0_i32_0 = arith.constant 0 : i32
    return %arg0, %c0_i32 : i32, i32
  }
}

</mosaic_0001>

<llo_original>
// kernel: tpu_custom_call.1
$region0: #{tpu_custom_call.1}
  #allocation0 [shape = 'u32[]', space=smem, size = 0x4, offset = 0x4, fixed_abs, tag = 'smem constant byte address 0x4 - core index']
  #allocation1 [shape = 'u32[144,128]{1,0:T(1,128)}', space=vmem, size = 0x12000, scoped, tag = 'internal scratch']
  %s0 = inlined_call_operand.hbm [shape: f32[8,1024], index: 0, kind: input, shape index: {}]
  %s1 = inlined_call_operand.hbm [shape: bf16[1024,128], index: 1, kind: input, shape index: {}]
  %s2 = inlined_call_operand.vmem [shape: f32[1,128], index: 2, kind: input, shape index: {}]
  %s3 = inlined_call_operand.hbm [shape: bf16[128,128], index: 3, kind: input, shape index: {}]
  %s4 = inlined_call_operand.vmem [shape: f32[1,128], index: 4, kind: input, shape index: {}]
  %s5 = inlined_call_operand.hbm [shape: bf16[128,128], index: 5, kind: input, shape index: {}]
  %s6 = inlined_call_operand.vmem [shape: f32[1,128], index: 6, kind: input, shape index: {}]
  %s7 = inlined_call_operand.hbm [shape: bf16[128,128], index: 7, kind: input, shape index: {}]
  %s8 = inlined_call_operand.vmem [shape: f32[1,128], index: 8, kind: input, shape index: {}]
  %s9 = inlined_call_operand.hbm [shape: bf16[128,128], index: 9, kind: input, shape index: {}]
  %s10 = inlined_call_operand.vmem [shape: f32[1,128], index: 10, kind: input, shape index: {}]
  %s11 = inlined_call_operand.hbm [shape: f32[8,128], index: 11, kind: output, shape index: {}]
  %s12 = sld [smem:[#allocation0]]
  $region78: #{tpu_custom_call.1} parent=0
    _
  %s14 = ssub.s32 1, %s12
  %s15 = scalar_select 0, %s14, %s12
  $region1: #{tpu_custom_call.1} parent=0
    #allocation2 [shape = 'u8[32768]{0}', space=vmem, size = 0x8000, scoped, tag = 'input window, operand 0, single buffered']
    #allocation3 [shape = 's32[1]{0}', space=sflag, size = 0x4, scoped, tag = 'scoped memory for tpu_custom_call.1']
    #allocation4 [shape = 's32[1]{0}', space=sflag, size = 0x4, scoped, tag = 'scoped memory for tpu_custom_call.1']
    #allocation5 [shape = 'u8[262144]{0}', space=vmem, size = 0x40000, scoped, tag = 'input window, operand 1, single buffered']
    #allocation6 [shape = 's32[1]{0}', space=sflag, size = 0x4, scoped, tag = 'scoped memory for tpu_custom_call.1']
    #allocation7 [shape = 'u8[32768]{0}', space=vmem, size = 0x8000, scoped, tag = 'input window, operand 3, single buffered']
    #allocation8 [shape = 'u8[32768]{0}', space=vmem, size = 0x8000, scoped, tag = 'input window, operand 5, single buffered']
    #allocation9 [shape = 's32[1]{0}', space=sflag, size = 0x4, scoped, tag = 'scoped memory for tpu_custom_call.1']
    #allocation10 [shape = 'u8[32768]{0}', space=vmem, size = 0x8000, scoped, tag = 'input window, operand 7, single buffered']
    #allocation11 [shape = 'u8[32768]{0}', space=vmem, size = 0x8000, scoped, tag = 'input window, operand 9, single buffered']
    #allocation12 [shape = 's32[1]{0}', space=sflag, size = 0x4, scoped, tag = 'scoped memory for tpu_custom_call.1']
    #allocation13 [shape = 'u8[4096]{0}', space=vmem, size = 0x1000, scoped, tag = 'output window, operand 0, single buffered']
    %16 = vsyncpa [#allocation3], 0
    %17 = vsyncpa [#allocation6], 0
    %18 = vsyncpa [#allocation9], 0
    %19 = vsyncpa [#allocation12], 0
    %20 = vsyncpa [#allocation4], 0
    // Predicated region
    $region2: #{tpu_custom_call.1} parent=1 // pred_check
      _
    $region3: #{tpu_custom_call.1} parent=1 // pred_check_branch
      %22 = sbr.rel (0) target = $region5
    $region4: #{tpu_custom_call.1} parent=1 // pred_region
      %s24 = ssub.s32 1024, 1024
      %25 = vsyncadd [#allocation3], %s24
      %s27 = sshll.u32 [#allocation2], 4
      %s28 = int_to_ptr.vmem [resolvable:$true] %s27
      %30 = dma.hbm_to_vmem [thread:$0]  %s0, 1024, %s28, [#allocation3]
    $region5: #{tpu_custom_call.1} parent=1 // pred_fallthru
      _
    // Predicated region
    $region6: #{tpu_custom_call.1} parent=1 // pred_check
      _
    $region7: #{tpu_custom_call.1} parent=1 // pred_check_branch
      %32 = sbr.rel (0) target = $region9
    $region8: #{tpu_custom_call.1} parent=1 // pred_region
      %s34 = ssub.s32 8192, 8192
      %35 = vsyncadd [#allocation6], %s34
      %s36 = sshll.u32 [#allocation5], 4
      %s37 = int_to_ptr.vmem [resolvable:$true] %s36
      %42 = dma.hbm_to_vmem [thread:$0]  %s1, 8192, %s37, [#allocation6], 64, 64, 4
    $region9: #{tpu_custom_call.1} parent=1 // pred_fallthru
      _
    // Predicated region
    $region10: #{tpu_custom_call.1} parent=1 // pred_check
      _
    $region11: #{tpu_custom_call.1} parent=1 // pred_check_branch
      %44 = sbr.rel (0) target = $region13
    $region12: #{tpu_custom_call.1} parent=1 // pred_region
      _
    $region13: #{tpu_custom_call.1} parent=1 // pred_fallthru
      _
    // Predicated region
    $region14: #{tpu_custom_call.1} parent=1 // pred_check
      _
    $region15: #{tpu_custom_call.1} parent=1 // pred_check_branch
      %46 = sbr.rel (0) target = $region17
    $region16: #{tpu_custom_call.1} parent=1 // pred_region
      %s48 = ssub.s32 1024, 1024
      %49 = vsyncadd [#allocation6], %s48
      %s50 = sshll.u32 [#allocation7], 4
      %s51 = int_to_ptr.vmem [resolvable:$true] %s50
      %56 = dma.hbm_to_vmem [thread:$0]  %s3, 1024, %s51, [#allocation6], 64, 64, 4
    $region17: #{tpu_custom_call.1} parent=1 // pred_fallthru
      _
    // Predicated region
    $region18: #{tpu_custom_call.1} parent=1 // pred_check
      _
    $region19: #{tpu_custom_call.1} parent=1 // pred_check_branch
      %58 = sbr.rel (0) target = $region21
    $region20: #{tpu_custom_call.1} parent=1 // pred_region
      _
    $region21: #{tpu_custom_call.1} parent=1 // pred_fallthru
      _
    // Predicated region
    $region22: #{tpu_custom_call.1} parent=1 // pred_check
      _
    $region23: #{tpu_custom_call.1} parent=1 // pred_check_branch
      %60 = sbr.rel (0) target = $region25
    $region24: #{tpu_custom_call.1} parent=1 // pred_region
      %s62 = ssub.s32 1024, 1024
      %63 = vsyncadd [#allocation9], %s62
      %s64 = sshll.u32 [#allocation8], 4
      %s65 = int_to_ptr.vmem [resolvable:$true] %s64
      %70 = dma.hbm_to_vmem [thread:$0]  %s5, 1024, %s65, [#allocation9], 64, 64, 4
    $region25: #{tpu_custom_call.1} parent=1 // pred_fallthru
      _
    // Predicated region
    $region26: #{tpu_custom_call.1} parent=1 // pred_check
      _
    $region27: #{tpu_custom_call.1} parent=1 // pred_check_branch
      %72 = sbr.rel (0) target = $region29
    $region28: #{tpu_custom_call.1} parent=1 // pred_region
      _
    $region29: #{tpu_custom_call.1} parent=1 // pred_fallthru
      _
    // Predicated region
    $region30: #{tpu_custom_call.1} parent=1 // pred_check
      _
    $region31: #{tpu_custom_call.1} parent=1 // pred_check_branch
      %74 = sbr.rel (0) target = $region33
    $region32: #{tpu_custom_call.1} parent=1 // pred_region
      %s76 = ssub.s32 1024, 1024
      %77 = vsyncadd [#allocation9], %s76
      %s78 = sshll.u32 [#allocation10], 4
      %s79 = int_to_ptr.vmem [resolvable:$true] %s78
      %84 = dma.hbm_to_vmem [thread:$0]  %s7, 1024, %s79, [#allocation9], 64, 64, 4
    $region33: #{tpu_custom_call.1} parent=1 // pred_fallthru
      _
    // Predicated region
    $region34: #{tpu_custom_call.1} parent=1 // pred_check
      _
    $region35: #{tpu_custom_call.1} parent=1 // pred_check_branch
      %86 = sbr.rel (0) target = $region37
    $region36: #{tpu_custom_call.1} parent=1 // pred_region
      _
    $region37: #{tpu_custom_call.1} parent=1 // pred_fallthru
      _
    // Predicated region
    $region38: #{tpu_custom_call.1} parent=1 // pred_check
      _
    $region39: #{tpu_custom_call.1} parent=1 // pred_check_branch
      %88 = sbr.rel (0) target = $region41
    $region40: #{tpu_custom_call.1} parent=1 // pred_region
      %s90 = ssub.s32 1024, 1024
      %91 = vsyncadd [#allocation12], %s90
      %s92 = sshll.u32 [#allocation11], 4
      %s93 = int_to_ptr.vmem [resolvable:$true] %s92
      %98 = dma.hbm_to_vmem [thread:$0]  %s9, 1024, %s93, [#allocation12], 64, 64, 4
    $region41: #{tpu_custom_call.1} parent=1 // pred_fallthru
      _
    // Predicated region
    $region42: #{tpu_custom_call.1} parent=1 // pred_check
      _
    $region43: #{tpu_custom_call.1} parent=1 // pred_check_branch
      %100 = sbr.rel (0) target = $region45
    $region44: #{tpu_custom_call.1} parent=1 // pred_region
      _
    $region45: #{tpu_custom_call.1} parent=1 // pred_fallthru
      _
    // Predicated region
    $region46: #{tpu_custom_call.1} parent=1 // pred_check
      _
    $region47: #{tpu_custom_call.1} parent=1 // pred_check_branch
      %102 = sbr.rel (0) target = $region49
    $region48: #{tpu_custom_call.1} parent=1 // pred_region
      %103 = dma.done [#allocation3], 1024
    $region49: #{tpu_custom_call.1} parent=1 // pred_fallthru
      _
    // Predicated region
    $region50: #{tpu_custom_call.1} parent=1 // pred_check
      _
    $region51: #{tpu_custom_call.1} parent=1 // pred_check_branch
      %105 = sbr.rel (0) target = $region53
    $region52: #{tpu_custom_call.1} parent=1 // pred_region
      %106 = dma.done [#allocation6], 8192
    $region53: #{tpu_custom_call.1} parent=1 // pred_fallthru
      _
    // Predicated region
    $region54: #{tpu_custom_call.1} parent=1 // pred_check
      _
    $region55: #{tpu_custom_call.1} parent=1 // pred_check_branch
      %108 = sbr.rel (0) target = $region57
    $region56: #{tpu_custom_call.1} parent=1 // pred_region
      %109 = dma.done [#allocation6], 1024
    $region57: #{tpu_custom_call.1} parent=1 // pred_fallthru
      _
    // Predicated region
    $region58: #{tpu_custom_call.1} parent=1 // pred_check
      _
    $region59: #{tpu_custom_call.1} parent=1 // pred_check_branch
      %111 = sbr.rel (0) target = $region61
    $region60: #{tpu_custom_call.1} parent=1 // pred_region
      %112 = dma.done [#allocation9], 1024
    $region61: #{tpu_custom_call.1} parent=1 // pred_fallthru
      _
    // Predicated region
    $region62: #{tpu_custom_call.1} parent=1 // pred_check
      _
    $region63: #{tpu_custom_call.1} parent=1 // pred_check_branch
      %114 = sbr.rel (0) target = $region65
    $region64: #{tpu_custom_call.1} parent=1 // pred_region
      %115 = dma.done [#allocation9], 1024
    $region65: #{tpu_custom_call.1} parent=1 // pred_fallthru
      _
    // Predicated region
    $region66: #{tpu_custom_call.1} parent=1 // pred_check
      _
    $region67: #{tpu_custom_call.1} parent=1 // pred_check_branch
      %117 = sbr.rel (0) target = $region69
    $region68: #{tpu_custom_call.1} parent=1 // pred_region
      %118 = dma.done [#allocation12], 1024
    $region69: #{tpu_custom_call.1} parent=1 // pred_fallthru
      _
    %v120 = vld [vmem:[#allocation2] sm:$0xff]
    %v121 = vld [vmem:[#allocation2 + $0x8] sm:$0xff]
    %v122 = vld [vmem:[#allocation2 + $0x10] sm:$0xff]
    %v123 = vld [vmem:[#allocation2 + $0x18] sm:$0xff]
    %v124 = vld [vmem:[#allocation2 + $0x20] sm:$0xff]
    %v125 = vld [vmem:[#allocation2 + $0x28] sm:$0xff]
    %v126 = vld [vmem:[#allocation2 + $0x30] sm:$0xff]
    %v127 = vld [vmem:[#allocation2 + $0x38] sm:$0xff]
    %v128 = vpack.c.bf16 %v120, %v120
    %v129 = vpack.c.bf16 %v121, %v121
    %v130 = vpack.c.bf16 %v122, %v122
    %v131 = vpack.c.bf16 %v123, %v123
    %v132 = vpack.c.bf16 %v124, %v124
    %v133 = vpack.c.bf16 %v125, %v125
    %v134 = vpack.c.bf16 %v126, %v126
    %v135 = vpack.c.bf16 %v127, %v127
    %v136 = vld [vmem:[#allocation5] sm:$0xf]
    %v137 = vld [vmem:[#allocation5 + $0x4] sm:$0xf]
    %v138 = vld [vmem:[#allocation5 + $0x8] sm:$0xf]
    %v139 = vld [vmem:[#allocation5 + $0xc] sm:$0xf]
    %v140 = vld [vmem:[#allocation5 + $0x10] sm:$0xf]
    %v141 = vld [vmem:[#allocation5 + $0x14] sm:$0xf]
    %v142 = vld [vmem:[#allocation5 + $0x18] sm:$0xf]
    %v143 = vld [vmem:[#allocation5 + $0x1c] sm:$0xf]
    %v144 = vld [vmem:[#allocation5 + $0x20] sm:$0xf]
    %v145 = vld [vmem:[#allocation5 + $0x24] sm:$0xf]
    %v146 = vld [vmem:[#allocation5 + $0x28] sm:$0xf]
    %v147 = vld [vmem:[#allocation5 + $0x2c] sm:$0xf]
    %v148 = vld [vmem:[#allocation5 + $0x30] sm:$0xf]
    %v149 = vld [vmem:[#allocation5 + $0x34] sm:$0xf]
    %v150 = vld [vmem:[#allocation5 + $0x38] sm:$0xf]
    %v151 = vld [vmem:[#allocation5 + $0x3c] sm:$0xf]
    %v152 = vld [vmem:[#allocation5 + $0x40] sm:$0xf]
    %v153 = vld [vmem:[#allocation5 + $0x44] sm:$0xf]
    %v154 = vld [vmem:[#allocation5 + $0x48] sm:$0xf]
    %v155 = vld [vmem:[#allocation5 + $0x4c] sm:$0xf]
    %v156 = vld [vmem:[#allocation5 + $0x50] sm:$0xf]
    %v157 = vld [vmem:[#allocation5 + $0x54] sm:$0xf]
    %v158 = vld [vmem:[#allocation5 + $0x58] sm:$0xf]
    %v159 = vld [vmem:[#allocation5 + $0x5c] sm:$0xf]
    %v160 = vld [vmem:[#allocation5 + $0x60] sm:$0xf]
    %v161 = vld [vmem:[#allocation5 + $0x64] sm:$0xf]
    %v162 = vld [vmem:[#allocation5 + $0x68] sm:$0xf]
    %v163 = vld [vmem:[#allocation5 + $0x6c] sm:$0xf]
    %v164 = vld [vmem:[#allocation5 + $0x70] sm:$0xf]
    %v165 = vld [vmem:[#allocation5 + $0x74] sm:$0xf]
    %v166 = vld [vmem:[#allocation5 + $0x78] sm:$0xf]
    %v167 = vld [vmem:[#allocation5 + $0x7c] sm:$0xf]
    %v168 = vld [vmem:[#allocation5 + $0x80] sm:$0xf]
    %v169 = vld [vmem:[#allocation5 + $0x84] sm:$0xf]
    %v170 = vld [vmem:[#allocation5 + $0x88] sm:$0xf]
    %v171 = vld [vmem:[#allocation5 + $0x8c] sm:$0xf]
    %v172 = vld [vmem:[#allocation5 + $0x90] sm:$0xf]
    %v173 = vld [vmem:[#allocation5 + $0x94] sm:$0xf]
    %v174 = vld [vmem:[#allocation5 + $0x98] sm:$0xf]
    %v175 = vld [vmem:[#allocation5 + $0x9c] sm:$0xf]
    %v176 = vld [vmem:[#allocation5 + $0xa0] sm:$0xf]
    %v177 = vld [vmem:[#allocation5 + $0xa4] sm:$0xf]
    %v178 = vld [vmem:[#allocation5 + $0xa8] sm:$0xf]
    %v179 = vld [vmem:[#allocation5 + $0xac] sm:$0xf]
    %v180 = vld [vmem:[#allocation5 + $0xb0] sm:$0xf]
    %v181 = vld [vmem:[#allocation5 + $0xb4] sm:$0xf]
    %v182 = vld [vmem:[#allocation5 + $0xb8] sm:$0xf]
    %v183 = vld [vmem:[#allocation5 + $0xbc] sm:$0xf]
    %v184 = vld [vmem:[#allocation5 + $0xc0] sm:$0xf]
    %v185 = vld [vmem:[#allocation5 + $0xc4] sm:$0xf]
    %v186 = vld [vmem:[#allocation5 + $0xc8] sm:$0xf]
    %v187 = vld [vmem:[#allocation5 + $0xcc] sm:$0xf]
    %v188 = vld [vmem:[#allocation5 + $0xd0] sm:$0xf]
    %v189 = vld [vmem:[#allocation5 + $0xd4] sm:$0xf]
    %v190 = vld [vmem:[#allocation5 + $0xd8] sm:$0xf]
    %v191 = vld [vmem:[#allocation5 + $0xdc] sm:$0xf]
    %v192 = vld [vmem:[#allocation5 + $0xe0] sm:$0xf]
    %v193 = vld [vmem:[#allocation5 + $0xe4] sm:$0xf]
    %v194 = vld [vmem:[#allocation5 + $0xe8] sm:$0xf]
    %v195 = vld [vmem:[#allocation5 + $0xec] sm:$0xf]
    %v196 = vld [vmem:[#allocation5 + $0xf0] sm:$0xf]
    %v197 = vld [vmem:[#allocation5 + $0xf4] sm:$0xf]
    %v198 = vld [vmem:[#allocation5 + $0xf8] sm:$0xf]
    %v199 = vld [vmem:[#allocation5 + $0xfc] sm:$0xf]
    %v200 = vld [vmem:[#allocation5 + $0x100] sm:$0xf]
    %v201 = vld [vmem:[#allocation5 + $0x104] sm:$0xf]
    %v202 = vld [vmem:[#allocation5 + $0x108] sm:$0xf]
    %v203 = vld [vmem:[#allocation5 + $0x10c] sm:$0xf]
    %v204 = vld [vmem:[#allocation5 + $0x110] sm:$0xf]
    %v205 = vld [vmem:[#allocation5 + $0x114] sm:$0xf]
    %v206 = vld [vmem:[#allocation5 + $0x118] sm:$0xf]
    %v207 = vld [vmem:[#allocation5 + $0x11c] sm:$0xf]
    %v208 = vld [vmem:[#allocation5 + $0x120] sm:$0xf]
    %v209 = vld [vmem:[#allocation5 + $0x124] sm:$0xf]
    %v210 = vld [vmem:[#allocation5 + $0x128] sm:$0xf]
    %v211 = vld [vmem:[#allocation5 + $0x12c] sm:$0xf]
    %v212 = vld [vmem:[#allocation5 + $0x130] sm:$0xf]
    %v213 = vld [vmem:[#allocation5 + $0x134] sm:$0xf]
    %v214 = vld [vmem:[#allocation5 + $0x138] sm:$0xf]
    %v215 = vld [vmem:[#allocation5 + $0x13c] sm:$0xf]
    %v216 = vld [vmem:[#allocation5 + $0x140] sm:$0xf]
    %v217 = vld [vmem:[#allocation5 + $0x144] sm:$0xf]
    %v218 = vld [vmem:[#allocation5 + $0x148] sm:$0xf]
    %v219 = vld [vmem:[#allocation5 + $0x14c] sm:$0xf]
    %v220 = vld [vmem:[#allocation5 + $0x150] sm:$0xf]
    %v221 = vld [vmem:[#allocation5 + $0x154] sm:$0xf]
    %v222 = vld [vmem:[#allocation5 + $0x158] sm:$0xf]
    %v223 = vld [vmem:[#allocation5 + $0x15c] sm:$0xf]
    %v224 = vld [vmem:[#allocation5 + $0x160] sm:$0xf]
    %v225 = vld [vmem:[#allocation5 + $0x164] sm:$0xf]
    %v226 = vld [vmem:[#allocation5 + $0x168] sm:$0xf]
    %v227 = vld [vmem:[#allocation5 + $0x16c] sm:$0xf]
    %v228 = vld [vmem:[#allocation5 + $0x170] sm:$0xf]
    %v229 = vld [vmem:[#allocation5 + $0x174] sm:$0xf]
    %v230 = vld [vmem:[#allocation5 + $0x178] sm:$0xf]
    %v231 = vld [vmem:[#allocation5 + $0x17c] sm:$0xf]
    %v232 = vld [vmem:[#allocation5 + $0x180] sm:$0xf]
    %v233 = vld [vmem:[#allocation5 + $0x184] sm:$0xf]
    %v234 = vld [vmem:[#allocation5 + $0x188] sm:$0xf]
    %v235 = vld [vmem:[#allocation5 + $0x18c] sm:$0xf]
    %v236 = vld [vmem:[#allocation5 + $0x190] sm:$0xf]
    %v237 = vld [vmem:[#allocation5 + $0x194] sm:$0xf]
    %v238 = vld [vmem:[#allocation5 + $0x198] sm:$0xf]
    %v239 = vld [vmem:[#allocation5 + $0x19c] sm:$0xf]
    %v240 = vld [vmem:[#allocation5 + $0x1a0] sm:$0xf]
    %v241 = vld [vmem:[#allocation5 + $0x1a4] sm:$0xf]
    %v242 = vld [vmem:[#allocation5 + $0x1a8] sm:$0xf]
    %v243 = vld [vmem:[#allocation5 + $0x1ac] sm:$0xf]
    %v244 = vld [vmem:[#allocation5 + $0x1b0] sm:$0xf]
    %v245 = vld [vmem:[#allocation5 + $0x1b4] sm:$0xf]
    %v246 = vld [vmem:[#allocation5 + $0x1b8] sm:$0xf]
    %v247 = vld [vmem:[#allocation5 + $0x1bc] sm:$0xf]
    %v248 = vld [vmem:[#allocation5 + $0x1c0] sm:$0xf]
    %v249 = vld [vmem:[#allocation5 + $0x1c4] sm:$0xf]
    %v250 = vld [vmem:[#allocation5 + $0x1c8] sm:$0xf]
    %v251 = vld [vmem:[#allocation5 + $0x1cc] sm:$0xf]
    %v252 = vld [vmem:[#allocation5 + $0x1d0] sm:$0xf]
    %v253 = vld [vmem:[#allocation5 + $0x1d4] sm:$0xf]
    %v254 = vld [vmem:[#allocation5 + $0x1d8] sm:$0xf]
    %v255 = vld [vmem:[#allocation5 + $0x1dc] sm:$0xf]
    %v256 = vld [vmem:[#allocation5 + $0x1e0] sm:$0xf]
    %v257 = vld [vmem:[#allocation5 + $0x1e4] sm:$0xf]
    %v258 = vld [vmem:[#allocation5 + $0x1e8] sm:$0xf]
    %v259 = vld [vmem:[#allocation5 + $0x1ec] sm:$0xf]
    %v260 = vld [vmem:[#allocation5 + $0x1f0] sm:$0xf]
    %v261 = vld [vmem:[#allocation5 + $0x1f4] sm:$0xf]
    %v262 = vld [vmem:[#allocation5 + $0x1f8] sm:$0xf]
    %v263 = vld [vmem:[#allocation5 + $0x1fc] sm:$0xf]
    %v264 = vld [vmem:[%s2] sm:$0x1]
    %v266 = vlaneseq
    %v267 = vshrl.u32 %v266, 7
    %v268 = vsub.s32 0, %v267
    %v269 = vrot.slane %v264, %v268
    %v399 = vunpack.c.l.b16 %v136
    %v400 = vunpack.c.l.b16 %v137
    %v401 = vunpack.c.l.b16 %v138
    %v402 = vunpack.c.l.b16 %v139
    %v403 = vunpack.c.l.b16 %v140
    %v404 = vunpack.c.l.b16 %v141
    %v405 = vunpack.c.l.b16 %v142
    %v406 = vunpack.c.l.b16 %v143
    %v407 = vunpack.c.l.b16 %v144
    %v408 = vunpack.c.l.b16 %v145
    %v409 = vunpack.c.l.b16 %v146
    %v410 = vunpack.c.l.b16 %v147
    %v411 = vunpack.c.l.b16 %v148
    %v412 = vunpack.c.l.b16 %v149
    %v413 = vunpack.c.l.b16 %v150
    %v414 = vunpack.c.l.b16 %v151
    %v415 = vunpack.c.l.b16 %v152
    %v416 = vunpack.c.l.b16 %v153
    %v417 = vunpack.c.l.b16 %v154
    %v418 = vunpack.c.l.b16 %v155
    %v419 = vunpack.c.l.b16 %v156
    %v420 = vunpack.c.l.b16 %v157
    %v421 = vunpack.c.l.b16 %v158
    %v422 = vunpack.c.l.b16 %v159
    %v423 = vunpack.c.l.b16 %v160
    %v424 = vunpack.c.l.b16 %v161
    %v425 = vunpack.c.l.b16 %v162
    %v426 = vunpack.c.l.b16 %v163
    %v427 = vunpack.c.l.b16 %v164
    %v428 = vunpack.c.l.b16 %v165
    %v429 = vunpack.c.l.b16 %v166
    %v430 = vunpack.c.l.b16 %v167
    %v431 = vunpack.c.l.b16 %v168
    %v432 = vunpack.c.l.b16 %v169
    %v433 = vunpack.c.l.b16 %v170
    %v434 = vunpack.c.l.b16 %v171
    %v435 = vunpack.c.l.b16 %v172
    %v436 = vunpack.c.l.b16 %v173
    %v437 = vunpack.c.l.b16 %v174
    %v438 = vunpack.c.l.b16 %v175
    %v439 = vunpack.c.l.b16 %v176
    %v440 = vunpack.c.l.b16 %v177
    %v441 = vunpack.c.l.b16 %v178
    %v442 = vunpack.c.l.b16 %v179
    %v443 = vunpack.c.l.b16 %v180
    %v444 = vunpack.c.l.b16 %v181
    %v445 = vunpack.c.l.b16 %v182
    %v446 = vunpack.c.l.b16 %v183
    %v447 = vunpack.c.l.b16 %v184
    %v448 = vunpack.c.l.b16 %v185
    %v449 = vunpack.c.l.b16 %v186
    %v450 = vunpack.c.l.b16 %v187
    %v451 = vunpack.c.l.b16 %v188
    %v452 = vunpack.c.l.b16 %v189
    %v453 = vunpack.c.l.b16 %v190
    %v454 = vunpack.c.l.b16 %v191
    %v455 = vunpack.c.l.b16 %v192
    %v456 = vunpack.c.l.b16 %v193
    %v457 = vunpack.c.l.b16 %v194
    %v458 = vunpack.c.l.b16 %v195
    %v459 = vunpack.c.l.b16 %v196
    %v460 = vunpack.c.l.b16 %v197
    %v461 = vunpack.c.l.b16 %v198
    %v462 = vunpack.c.l.b16 %v199
    %v463 = vunpack.c.l.b16 %v200
    %v464 = vunpack.c.l.b16 %v201
    %v465 = vunpack.c.l.b16 %v202
    %v466 = vunpack.c.l.b16 %v203
    %v467 = vunpack.c.l.b16 %v204
    %v468 = vunpack.c.l.b16 %v205
    %v469 = vunpack.c.l.b16 %v206
    %v470 = vunpack.c.l.b16 %v207
    %v471 = vunpack.c.l.b16 %v208
    %v472 = vunpack.c.l.b16 %v209
    %v473 = vunpack.c.l.b16 %v210
    %v474 = vunpack.c.l.b16 %v211
    %v475 = vunpack.c.l.b16 %v212
    %v476 = vunpack.c.l.b16 %v213
    %v477 = vunpack.c.l.b16 %v214
    %v478 = vunpack.c.l.b16 %v215
    %v479 = vunpack.c.l.b16 %v216
    %v480 = vunpack.c.l.b16 %v217
    %v481 = vunpack.c.l.b16 %v218
    %v482 = vunpack.c.l.b16 %v219
    %v483 = vunpack.c.l.b16 %v220
    %v484 = vunpack.c.l.b16 %v221
    %v485 = vunpack.c.l.b16 %v222
    %v486 = vunpack.c.l.b16 %v223
    %v487 = vunpack.c.l.b16 %v224
    %v488 = vunpack.c.l.b16 %v225
    %v489 = vunpack.c.l.b16 %v226
    %v490 = vunpack.c.l.b16 %v227
    %v491 = vunpack.c.l.b16 %v228
    %v492 = vunpack.c.l.b16 %v229
    %v493 = vunpack.c.l.b16 %v230
    %v494 = vunpack.c.l.b16 %v231
    %v495 = vunpack.c.l.b16 %v232
    %v496 = vunpack.c.l.b16 %v233
    %v497 = vunpack.c.l.b16 %v234
    %v498 = vunpack.c.l.b16 %v235
    %v499 = vunpack.c.l.b16 %v236
    %v500 = vunpack.c.l.b16 %v237
    %v501 = vunpack.c.l.b16 %v238
    %v502 = vunpack.c.l.b16 %v239
    %v503 = vunpack.c.l.b16 %v240
    %v504 = vunpack.c.l.b16 %v241
    %v505 = vunpack.c.l.b16 %v242
    %v506 = vunpack.c.l.b16 %v243
    %v507 = vunpack.c.l.b16 %v244
    %v508 = vunpack.c.l.b16 %v245
    %v509 = vunpack.c.l.b16 %v246
    %v510 = vunpack.c.l.b16 %v247
    %v511 = vunpack.c.l.b16 %v248
    %v512 = vunpack.c.l.b16 %v249
    %v513 = vunpack.c.l.b16 %v250
    %v514 = vunpack.c.l.b16 %v251
    %v515 = vunpack.c.l.b16 %v252
    %v516 = vunpack.c.l.b16 %v253
    %v517 = vunpack.c.l.b16 %v254
    %v518 = vunpack.c.l.b16 %v255
    %v519 = vunpack.c.l.b16 %v256
    %v520 = vunpack.c.l.b16 %v257
    %v521 = vunpack.c.l.b16 %v258
    %v522 = vunpack.c.l.b16 %v259
    %v523 = vunpack.c.l.b16 %v260
    %v524 = vunpack.c.l.b16 %v261
    %v525 = vunpack.c.l.b16 %v262
    %v526 = vunpack.c.l.b16 %v263
    %v527 = vpack.c.b16 %v400, %v399
    %v528 = vpack.c.b16 %v402, %v401
    %v529 = vpack.c.b16 %v404, %v403
    %v530 = vpack.c.b16 %v406, %v405
    %v531 = vpack.c.b16 %v408, %v407
    %v532 = vpack.c.b16 %v410, %v409
    %v533 = vpack.c.b16 %v412, %v411
    %v534 = vpack.c.b16 %v414, %v413
    %v535 = vpack.c.b16 %v416, %v415
    %v536 = vpack.c.b16 %v418, %v417
    %v537 = vpack.c.b16 %v420, %v419
    %v538 = vpack.c.b16 %v422, %v421
    %v539 = vpack.c.b16 %v424, %v423
    %v540 = vpack.c.b16 %v426, %v425
    %v541 = vpack.c.b16 %v428, %v427
    %v542 = vpack.c.b16 %v430, %v429
    %v543 = vpack.c.b16 %v432, %v431
    %v544 = vpack.c.b16 %v434, %v433
    %v545 = vpack.c.b16 %v436, %v435
    %v546 = vpack.c.b16 %v438, %v437
    %v547 = vpack.c.b16 %v440, %v439
    %v548 = vpack.c.b16 %v442, %v441
    %v549 = vpack.c.b16 %v444, %v443
    %v550 = vpack.c.b16 %v446, %v445
    %v551 = vpack.c.b16 %v448, %v447
    %v552 = vpack.c.b16 %v450, %v449
    %v553 = vpack.c.b16 %v452, %v451
    %v554 = vpack.c.b16 %v454, %v453
    %v555 = vpack.c.b16 %v456, %v455
    %v556 = vpack.c.b16 %v458, %v457
    %v557 = vpack.c.b16 %v460, %v459
    %v558 = vpack.c.b16 %v462, %v461
    %v559 = vpack.c.b16 %v464, %v463
    %v560 = vpack.c.b16 %v466, %v465
    %v561 = vpack.c.b16 %v468, %v467
    %v562 = vpack.c.b16 %v470, %v469
    %v563 = vpack.c.b16 %v472, %v471
    %v564 = vpack.c.b16 %v474, %v473
    %v565 = vpack.c.b16 %v476, %v475
    %v566 = vpack.c.b16 %v478, %v477
    %v567 = vpack.c.b16 %v480, %v479
    %v568 = vpack.c.b16 %v482, %v481
    %v569 = vpack.c.b16 %v484, %v483
    %v570 = vpack.c.b16 %v486, %v485
    %v571 = vpack.c.b16 %v488, %v487
    %v572 = vpack.c.b16 %v490, %v489
    %v573 = vpack.c.b16 %v492, %v491
    %v574 = vpack.c.b16 %v494, %v493
    %v575 = vpack.c.b16 %v496, %v495
    %v576 = vpack.c.b16 %v498, %v497
    %v577 = vpack.c.b16 %v500, %v499
    %v578 = vpack.c.b16 %v502, %v501
    %v579 = vpack.c.b16 %v504, %v503
    %v580 = vpack.c.b16 %v506, %v505
    %v581 = vpack.c.b16 %v508, %v507
    %v582 = vpack.c.b16 %v510, %v509
    %v583 = vpack.c.b16 %v512, %v511
    %v584 = vpack.c.b16 %v514, %v513
    %v585 = vpack.c.b16 %v516, %v515
    %v586 = vpack.c.b16 %v518, %v517
    %v587 = vpack.c.b16 %v520, %v519
    %v588 = vpack.c.b16 %v522, %v521
    %v589 = vpack.c.b16 %v524, %v523
    %v590 = vpack.c.b16 %v526, %v525
    %655 = vmatprep.subr.bf16.mxu0 0
    %656 = vmatpush1.bf16.msra.mxu0 %v534
    %657 = vmatprep.subr.bf16.mxu0 0
    %658 = vmatpush1.bf16.msra.mxu0 %v533
    %659 = vmatprep.subr.bf16.mxu0 0
    %660 = vmatpush1.bf16.msra.mxu0 %v532
    %661 = vmatprep.subr.bf16.mxu0 0
    %662 = vmatpush1.bf16.msra.mxu0 %v531
    %663 = vmatprep.subr.bf16.mxu0 0
    %664 = vmatpush1.bf16.msra.mxu0 %v530
    %665 = vmatprep.subr.bf16.mxu0 0
    %666 = vmatpush1.bf16.msra.mxu0 %v529
    %667 = vmatprep.subr.bf16.mxu0 0
    %668 = vmatpush1.bf16.msra.mxu0 %v528
    %669 = vmatprep.subr.bf16.mxu0 0
    %670 = vmatpush1.bf16.msra.mxu0 %v527
    %671 = vmatprep.subr.bf16.mxu0 0
    %672 = vmatpush2.bf16.msra.mxu0 %v542
    %673 = vmatprep.subr.bf16.mxu0 0
    %674 = vmatpush2.bf16.msra.mxu0 %v541
    %675 = vmatprep.subr.bf16.mxu0 0
    %676 = vmatpush2.bf16.msra.mxu0 %v540
    %677 = vmatprep.subr.bf16.mxu0 0
    %678 = vmatpush2.bf16.msra.mxu0 %v539
    %679 = vmatprep.subr.bf16.mxu0 0
    %680 = vmatpush2.bf16.msra.mxu0 %v538
    %681 = vmatprep.subr.bf16.mxu0 0
    %682 = vmatpush2.bf16.msra.mxu0 %v537
    %683 = vmatprep.subr.bf16.mxu0 0
    %684 = vmatpush2.bf16.msra.mxu0 %v536
    %685 = vmatprep.subr.bf16.mxu0 0
    %686 = vmatpush2.bf16.msra.mxu0 %v535
    %687 = vmatprep.mubr.bf16.mxu0 %v129
    %688 = vmatmul.mubr.bf16.gmra.mxu0 %v128
    %v689 = vpop.f32.mrf.mxu0
    %v690 = vadd.f32 %v269, %v689
    %v691 = vpop.f32.mrf.mxu0
    %v692 = vpop.f32.mrf.mxu0
    %v693 = vpop.f32.mrf.mxu0
    %694 = vdwg.mxu0
    %695 = vmatprep.subr.bf16.mxu0 0
    %696 = vmatpush1.bf16.msra.mxu0 %v550
    %697 = vmatprep.subr.bf16.mxu0 0
    %698 = vmatpush1.bf16.msra.mxu0 %v549
    %699 = vmatprep.subr.bf16.mxu0 0
    %700 = vmatpush1.bf16.msra.mxu0 %v548
    %701 = vmatprep.subr.bf16.mxu0 0
    %702 = vmatpush1.bf16.msra.mxu0 %v547
    %703 = vmatprep.subr.bf16.mxu0 0
    %704 = vmatpush1.bf16.msra.mxu0 %v546
    %705 = vmatprep.subr.bf16.mxu0 0
    %706 = vmatpush1.bf16.msra.mxu0 %v545
    %707 = vmatprep.subr.bf16.mxu0 0
    %708 = vmatpush1.bf16.msra.mxu0 %v544
    %709 = vmatprep.subr.bf16.mxu0 0
    %710 = vmatpush1.bf16.msra.mxu0 %v543
    %711 = vmatprep.subr.bf16.mxu0 0
    %712 = vmatpush2.bf16.msra.mxu0 %v558
    %713 = vmatprep.subr.bf16.mxu0 0
    %714 = vmatpush2.bf16.msra.mxu0 %v557
    %715 = vmatprep.subr.bf16.mxu0 0
    %716 = vmatpush2.bf16.msra.mxu0 %v556
    %717 = vmatprep.subr.bf16.mxu0 0
    %718 = vmatpush2.bf16.msra.mxu0 %v555
    %719 = vmatprep.subr.bf16.mxu0 0
    %720 = vmatpush2.bf16.msra.mxu0 %v554
    %721 = vmatprep.subr.bf16.mxu0 0
    %722 = vmatpush2.bf16.msra.mxu0 %v553
    %723 = vmatprep.subr.bf16.mxu0 0
    %724 = vmatpush2.bf16.msra.mxu0 %v552
    %725 = vmatprep.subr.bf16.mxu0 0
    %726 = vmatpush2.bf16.msra.mxu0 %v551
    %727 = vmatprep.mubr.bf16.mxu0 %v131
    %728 = vmatmul.mubr.bf16.gmra.mxu0 %v130
    %v729 = vpop.f32.mrf.mxu0
    %v730 = vadd.f32 %v690, %v729
    %v731 = vpop.f32.mrf.mxu0
    %v732 = vpop.f32.mrf.mxu0
    %v733 = vpop.f32.mrf.mxu0
    %734 = vdwg.mxu0
    %735 = vmatprep.subr.bf16.mxu0 0
    %736 = vmatpush1.bf16.msra.mxu0 %v566
    %737 = vmatprep.subr.bf16.mxu0 0
    %738 = vmatpush1.bf16.msra.mxu0 %v565
    %739 = vmatprep.subr.bf16.mxu0 0
    %740 = vmatpush1.bf16.msra.mxu0 %v564
    %741 = vmatprep.subr.bf16.mxu0 0
    %742 = vmatpush1.bf16.msra.mxu0 %v563
    %743 = vmatprep.subr.bf16.mxu0 0
    %744 = vmatpush1.bf16.msra.mxu0 %v562
    %745 = vmatprep.subr.bf16.mxu0 0
    %746 = vmatpush1.bf16.msra.mxu0 %v561
    %747 = vmatprep.subr.bf16.mxu0 0
    %748 = vmatpush1.bf16.msra.mxu0 %v560
    %749 = vmatprep.subr.bf16.mxu0 0
    %750 = vmatpush1.bf16.msra.mxu0 %v559
    %751 = vmatprep.subr.bf16.mxu0 0
    %752 = vmatpush2.bf16.msra.mxu0 %v574
    %753 = vmatprep.subr.bf16.mxu0 0
    %754 = vmatpush2.bf16.msra.mxu0 %v573
    %755 = vmatprep.subr.bf16.mxu0 0
    %756 = vmatpush2.bf16.msra.mxu0 %v572
    %757 = vmatprep.subr.bf16.mxu0 0
    %758 = vmatpush2.bf16.msra.mxu0 %v571
    %759 = vmatprep.subr.bf16.mxu0 0
    %760 = vmatpush2.bf16.msra.mxu0 %v570
    %761 = vmatprep.subr.bf16.mxu0 0
    %762 = vmatpush2.bf16.msra.mxu0 %v569
    %763 = vmatprep.subr.bf16.mxu0 0
    %764 = vmatpush2.bf16.msra.mxu0 %v568
    %765 = vmatprep.subr.bf16.mxu0 0
    %766 = vmatpush2.bf16.msra.mxu0 %v567
    %767 = vmatprep.mubr.bf16.mxu0 %v133
    %768 = vmatmul.mubr.bf16.gmra.mxu0 %v132
    %v769 = vpop.f32.mrf.mxu0
    %v770 = vadd.f32 %v730, %v769
    %v771 = vpop.f32.mrf.mxu0
    %v772 = vpop.f32.mrf.mxu0
    %v773 = vpop.f32.mrf.mxu0
    %774 = vdwg.mxu0
    %775 = vmatprep.subr.bf16.mxu0 0
    %776 = vmatpush1.bf16.msra.mxu0 %v582
    %777 = vmatprep.subr.bf16.mxu0 0
    %778 = vmatpush1.bf16.msra.mxu0 %v581
    %779 = vmatprep.subr.bf16.mxu0 0
    %780 = vmatpush1.bf16.msra.mxu0 %v580
    %781 = vmatprep.subr.bf16.mxu0 0
    %782 = vmatpush1.bf16.msra.mxu0 %v579
    %783 = vmatprep.subr.bf16.mxu0 0
    %784 = vmatpush1.bf16.msra.mxu0 %v578
    %785 = vmatprep.subr.bf16.mxu0 0
    %786 = vmatpush1.bf16.msra.mxu0 %v577
    %787 = vmatprep.subr.bf16.mxu0 0
    %788 = vmatpush1.bf16.msra.mxu0 %v576
    %789 = vmatprep.subr.bf16.mxu0 0
    %790 = vmatpush1.bf16.msra.mxu0 %v575
    %791 = vmatprep.subr.bf16.mxu0 0
    %792 = vmatpush2.bf16.msra.mxu0 %v590
    %793 = vmatprep.subr.bf16.mxu0 0
    %794 = vmatpush2.bf16.msra.mxu0 %v589
    %795 = vmatprep.subr.bf16.mxu0 0
    %796 = vmatpush2.bf16.msra.mxu0 %v588
    %797 = vmatprep.subr.bf16.mxu0 0
    %798 = vmatpush2.bf16.msra.mxu0 %v587
    %799 = vmatprep.subr.bf16.mxu0 0
    %800 = vmatpush2.bf16.msra.mxu0 %v586
    %801 = vmatprep.subr.bf16.mxu0 0
    %802 = vmatpush2.bf16.msra.mxu0 %v585
    %803 = vmatprep.subr.bf16.mxu0 0
    %804 = vmatpush2.bf16.msra.mxu0 %v584
    %805 = vmatprep.subr.bf16.mxu0 0
    %806 = vmatpush2.bf16.msra.mxu0 %v583
    %807 = vmatprep.mubr.bf16.mxu0 %v135
    %808 = vmatmul.mubr.bf16.gmra.mxu0 %v134
    %v809 = vpop.f32.mrf.mxu0
    %v810 = vadd.f32 %v770, %v809
    %v811 = vpop.f32.mrf.mxu0
    %v812 = vpop.f32.mrf.mxu0
    %v813 = vpop.f32.mrf.mxu0
    %814 = vdwg.mxu0
    %v815 = vtanh.pop %v810
    %v816 = vpack.c.bf16 %v815, %v815
    %v817 = vld [vmem:[#allocation7] sm:$0xf]
    %v818 = vld [vmem:[#allocation7 + $0x4] sm:$0xf]
    %v819 = vld [vmem:[#allocation7 + $0x8] sm:$0xf]
    %v820 = vld [vmem:[#allocation7 + $0xc] sm:$0xf]
    %v821 = vld [vmem:[#allocation7 + $0x10] sm:$0xf]
    %v822 = vld [vmem:[#allocation7 + $0x14] sm:$0xf]
    %v823 = vld [vmem:[#allocation7 + $0x18] sm:$0xf]
    %v824 = vld [vmem:[#allocation7 + $0x1c] sm:$0xf]
    %v825 = vld [vmem:[#allocation7 + $0x20] sm:$0xf]
    %v826 = vld [vmem:[#allocation7 + $0x24] sm:$0xf]
    %v827 = vld [vmem:[#allocation7 + $0x28] sm:$0xf]
    %v828 = vld [vmem:[#allocation7 + $0x2c] sm:$0xf]
    %v829 = vld [vmem:[#allocation7 + $0x30] sm:$0xf]
    %v830 = vld [vmem:[#allocation7 + $0x34] sm:$0xf]
    %v831 = vld [vmem:[#allocation7 + $0x38] sm:$0xf]
    %v832 = vld [vmem:[#allocation7 + $0x3c] sm:$0xf]
    %v833 = vld [vmem:[%s4] sm:$0x1]
    %v835 = vlaneseq
    %v836 = vshrl.u32 %v835, 7
    %v837 = vsub.s32 0, %v836
    %v838 = vrot.slane %v833, %v837
    %v856 = vunpack.c.l.b16 %v817
    %v857 = vunpack.c.l.b16 %v818
    %v858 = vunpack.c.l.b16 %v819
    %v859 = vunpack.c.l.b16 %v820
    %v860 = vunpack.c.l.b16 %v821
    %v861 = vunpack.c.l.b16 %v822
    %v862 = vunpack.c.l.b16 %v823
    %v863 = vunpack.c.l.b16 %v824
    %v864 = vunpack.c.l.b16 %v825
    %v865 = vunpack.c.l.b16 %v826
    %v866 = vunpack.c.l.b16 %v827
    %v867 = vunpack.c.l.b16 %v828
    %v868 = vunpack.c.l.b16 %v829
    %v869 = vunpack.c.l.b16 %v830
    %v870 = vunpack.c.l.b16 %v831
    %v871 = vunpack.c.l.b16 %v832
    %v872 = vpack.c.b16 %v857, %v856
    %v873 = vpack.c.b16 %v859, %v858
    %v874 = vpack.c.b16 %v861, %v860
    %v875 = vpack.c.b16 %v863, %v862
    %v876 = vpack.c.b16 %v865, %v864
    %v877 = vpack.c.b16 %v867, %v866
    %v878 = vpack.c.b16 %v869, %v868
    %v879 = vpack.c.b16 %v871, %v870
    %888 = vmatprep.subr.bf16.mxu0 0
    %889 = vmatpush1.bf16.msra.mxu0 %v879
    %890 = vmatprep.subr.bf16.mxu0 0
    %891 = vmatpush1.bf16.msra.mxu0 %v878
    %892 = vmatprep.subr.bf16.mxu0 0
    %893 = vmatpush1.bf16.msra.mxu0 %v877
    %894 = vmatprep.subr.bf16.mxu0 0
    %895 = vmatpush1.bf16.msra.mxu0 %v876
    %896 = vmatprep.subr.bf16.mxu0 0
    %897 = vmatpush1.bf16.msra.mxu0 %v875
    %898 = vmatprep.subr.bf16.mxu0 0
    %899 = vmatpush1.bf16.msra.mxu0 %v874
    %900 = vmatprep.subr.bf16.mxu0 0
    %901 = vmatpush1.bf16.msra.mxu0 %v873
    %902 = vmatprep.subr.bf16.mxu0 0
    %903 = vmatpush1.bf16.msra.mxu0 %v872
    %904 = vmatprep.subr.bf16.mxu0 0
    %905 = vmatpush2.bf16.msra.mxu0 0
    %906 = vmatprep.subr.bf16.mxu0 0
    %907 = vmatpush2.bf16.msra.mxu0 0
    %908 = vmatprep.subr.bf16.mxu0 0
    %909 = vmatpush2.bf16.msra.mxu0 0
    %910 = vmatprep.subr.bf16.mxu0 0
    %911 = vmatpush2.bf16.msra.mxu0 0
    %912 = vmatprep.subr.bf16.mxu0 0
    %913 = vmatpush2.bf16.msra.mxu0 0
    %914 = vmatprep.subr.bf16.mxu0 0
    %915 = vmatpush2.bf16.msra.mxu0 0
    %916 = vmatprep.subr.bf16.mxu0 0
    %917 = vmatpush2.bf16.msra.mxu0 0
    %918 = vmatprep.subr.bf16.mxu0 0
    %919 = vmatpush2.bf16.msra.mxu0 0
    %920 = vmatprep.mubr.bf16.mxu0 0
    %921 = vmatmul.mubr.bf16.gmra.mxu0 %v816
    %v922 = vpop.f32.mrf.mxu0
    %v923 = vadd.f32 %v838, %v922
    %v924 = vpop.f32.mrf.mxu0
    %v925 = vpop.f32.mrf.mxu0
    %v926 = vpop.f32.mrf.mxu0
    %927 = vdwg.mxu0
    %v928 = vtanh.pop %v923
    %v929 = vpack.c.bf16 %v928, %v928
    %v930 = vld [vmem:[#allocation8] sm:$0xf]
    %v931 = vld [vmem:[#allocation8 + $0x4] sm:$0xf]
    %v932 = vld [vmem:[#allocation8 + $0x8] sm:$0xf]
    %v933 = vld [vmem:[#allocation8 + $0xc] sm:$0xf]
    %v934 = vld [vmem:[#allocation8 + $0x10] sm:$0xf]
    %v935 = vld [vmem:[#allocation8 + $0x14] sm:$0xf]
    %v936 = vld [vmem:[#allocation8 + $0x18] sm:$0xf]
    %v937 = vld [vmem:[#allocation8 + $0x1c] sm:$0xf]
    %v938 = vld [vmem:[#allocation8 + $0x20] sm:$0xf]
    %v939 = vld [vmem:[#allocation8 + $0x24] sm:$0xf]
    %v940 = vld [vmem:[#allocation8 + $0x28] sm:$0xf]
    %v941 = vld [vmem:[#allocation8 + $0x2c] sm:$0xf]
    %v942 = vld [vmem:[#allocation8 + $0x30] sm:$0xf]
    %v943 = vld [vmem:[#allocation8 + $0x34] sm:$0xf]
    %v944 = vld [vmem:[#allocation8 + $0x38] sm:$0xf]
    %v945 = vld [vmem:[#allocation8 + $0x3c] sm:$0xf]
    %v946 = vld [vmem:[%s6] sm:$0x1]
    %v948 = vlaneseq
    %v949 = vshrl.u32 %v948, 7
    %v950 = vsub.s32 0, %v949
    %v951 = vrot.slane %v946, %v950
    %v969 = vunpack.c.l.b16 %v930
    %v970 = vunpack.c.l.b16 %v931
    %v971 = vunpack.c.l.b16 %v932
    %v972 = vunpack.c.l.b16 %v933
    %v973 = vunpack.c.l.b16 %v934
    %v974 = vunpack.c.l.b16 %v935
    %v975 = vunpack.c.l.b16 %v936
    %v976 = vunpack.c.l.b16 %v937
    %v977 = vunpack.c.l.b16 %v938
    %v978 = vunpack.c.l.b16 %v939
    %v979 = vunpack.c.l.b16 %v940
    %v980 = vunpack.c.l.b16 %v941
    %v981 = vunpack.c.l.b16 %v942
    %v982 = vunpack.c.l.b16 %v943
    %v983 = vunpack.c.l.b16 %v944
    %v984 = vunpack.c.l.b16 %v945
    %v985 = vpack.c.b16 %v970, %v969
    %v986 = vpack.c.b16 %v972, %v971
    %v987 = vpack.c.b16 %v974, %v973
    %v988 = vpack.c.b16 %v976, %v975
    %v989 = vpack.c.b16 %v978, %v977
    %v990 = vpack.c.b16 %v980, %v979
    %v991 = vpack.c.b16 %v982, %v981
    %v992 = vpack.c.b16 %v984, %v983
    %1001 = vmatprep.subr.bf16.mxu0 0
    %1002 = vmatpush1.bf16.msra.mxu0 %v992
    %1003 = vmatprep.subr.bf16.mxu0 0
    %1004 = vmatpush1.bf16.msra.mxu0 %v991
    %1005 = vmatprep.subr.bf16.mxu0 0
    %1006 = vmatpush1.bf16.msra.mxu0 %v990
    %1007 = vmatprep.subr.bf16.mxu0 0
    %1008 = vmatpush1.bf16.msra.mxu0 %v989
    %1009 = vmatprep.subr.bf16.mxu0 0
    %1010 = vmatpush1.bf16.msra.mxu0 %v988
    %1011 = vmatprep.subr.bf16.mxu0 0
    %1012 = vmatpush1.bf16.msra.mxu0 %v987
    %1013 = vmatprep.subr.bf16.mxu0 0
    %1014 = vmatpush1.bf16.msra.mxu0 %v986
    %1015 = vmatprep.subr.bf16.mxu0 0
    %1016 = vmatpush1.bf16.msra.mxu0 %v985
    %1017 = vmatprep.subr.bf16.mxu0 0
    %1018 = vmatpush2.bf16.msra.mxu0 0
    %1019 = vmatprep.subr.bf16.mxu0 0
    %1020 = vmatpush2.bf16.msra.mxu0 0
    %1021 = vmatprep.subr.bf16.mxu0 0
    %1022 = vmatpush2.bf16.msra.mxu0 0
    %1023 = vmatprep.subr.bf16.mxu0 0
    %1024 = vmatpush2.bf16.msra.mxu0 0
    %1025 = vmatprep.subr.bf16.mxu0 0
    %1026 = vmatpush2.bf16.msra.mxu0 0
    %1027 = vmatprep.subr.bf16.mxu0 0
    %1028 = vmatpush2.bf16.msra.mxu0 0
    %1029 = vmatprep.subr.bf16.mxu0 0
    %1030 = vmatpush2.bf16.msra.mxu0 0
    %1031 = vmatprep.subr.bf16.mxu0 0
    %1032 = vmatpush2.bf16.msra.mxu0 0
    %1033 = vmatprep.mubr.bf16.mxu0 0
    %1034 = vmatmul.mubr.bf16.gmra.mxu0 %v929
    %v1035 = vpop.f32.mrf.mxu0
    %v1036 = vadd.f32 %v951, %v1035
    %v1037 = vpop.f32.mrf.mxu0
    %v1038 = vpop.f32.mrf.mxu0
    %v1039 = vpop.f32.mrf.mxu0
    %1040 = vdwg.mxu0
    %v1041 = vtanh.pop %v1036
    %v1042 = vpack.c.bf16 %v1041, %v1041
    %v1043 = vld [vmem:[#allocation10] sm:$0xf]
    %v1044 = vld [vmem:[#allocation10 + $0x4] sm:$0xf]
    %v1045 = vld [vmem:[#allocation10 + $0x8] sm:$0xf]
    %v1046 = vld [vmem:[#allocation10 + $0xc] sm:$0xf]
    %v1047 = vld [vmem:[#allocation10 + $0x10] sm:$0xf]
    %v1048 = vld [vmem:[#allocation10 + $0x14] sm:$0xf]
    %v1049 = vld [vmem:[#allocation10 + $0x18] sm:$0xf]
    %v1050 = vld [vmem:[#allocation10 + $0x1c] sm:$0xf]
    %v1051 = vld [vmem:[#allocation10 + $0x20] sm:$0xf]
    %v1052 = vld [vmem:[#allocation10 + $0x24] sm:$0xf]
    %v1053 = vld [vmem:[#allocation10 + $0x28] sm:$0xf]
    %v1054 = vld [vmem:[#allocation10 + $0x2c] sm:$0xf]
    %v1055 = vld [vmem:[#allocation10 + $0x30] sm:$0xf]
    %v1056 = vld [vmem:[#allocation10 + $0x34] sm:$0xf]
    %v1057 = vld [vmem:[#allocation10 + $0x38] sm:$0xf]
    %v1058 = vld [vmem:[#allocation10 + $0x3c] sm:$0xf]
    %v1059 = vld [vmem:[%s8] sm:$0x1]
    %v1061 = vlaneseq
    %v1062 = vshrl.u32 %v1061, 7
    %v1063 = vsub.s32 0, %v1062
    %v1064 = vrot.slane %v1059, %v1063
    %v1082 = vunpack.c.l.b16 %v1043
    %v1083 = vunpack.c.l.b16 %v1044
    %v1084 = vunpack.c.l.b16 %v1045
    %v1085 = vunpack.c.l.b16 %v1046
    %v1086 = vunpack.c.l.b16 %v1047
    %v1087 = vunpack.c.l.b16 %v1048
    %v1088 = vunpack.c.l.b16 %v1049
    %v1089 = vunpack.c.l.b16 %v1050
    %v1090 = vunpack.c.l.b16 %v1051
    %v1091 = vunpack.c.l.b16 %v1052
    %v1092 = vunpack.c.l.b16 %v1053
    %v1093 = vunpack.c.l.b16 %v1054
    %v1094 = vunpack.c.l.b16 %v1055
    %v1095 = vunpack.c.l.b16 %v1056
    %v1096 = vunpack.c.l.b16 %v1057
    %v1097 = vunpack.c.l.b16 %v1058
    %v1098 = vpack.c.b16 %v1083, %v1082
    %v1099 = vpack.c.b16 %v1085, %v1084
    %v1100 = vpack.c.b16 %v1087, %v1086
    %v1101 = vpack.c.b16 %v1089, %v1088
    %v1102 = vpack.c.b16 %v1091, %v1090
    %v1103 = vpack.c.b16 %v1093, %v1092
    %v1104 = vpack.c.b16 %v1095, %v1094
    %v1105 = vpack.c.b16 %v1097, %v1096
    %1114 = vmatprep.subr.bf16.mxu0 0
    %1115 = vmatpush1.bf16.msra.mxu0 %v1105
    %1116 = vmatprep.subr.bf16.mxu0 0
    %1117 = vmatpush1.bf16.msra.mxu0 %v1104
    %1118 = vmatprep.subr.bf16.mxu0 0
    %1119 = vmatpush1.bf16.msra.mxu0 %v1103
    %1120 = vmatprep.subr.bf16.mxu0 0
    %1121 = vmatpush1.bf16.msra.mxu0 %v1102
    %1122 = vmatprep.subr.bf16.mxu0 0
    %1123 = vmatpush1.bf16.msra.mxu0 %v1101
    %1124 = vmatprep.subr.bf16.mxu0 0
    %1125 = vmatpush1.bf16.msra.mxu0 %v1100
    %1126 = vmatprep.subr.bf16.mxu0 0
    %1127 = vmatpush1.bf16.msra.mxu0 %v1099
    %1128 = vmatprep.subr.bf16.mxu0 0
    %1129 = vmatpush1.bf16.msra.mxu0 %v1098
    %1130 = vmatprep.subr.bf16.mxu0 0
    %1131 = vmatpush2.bf16.msra.mxu0 0
    %1132 = vmatprep.subr.bf16.mxu0 0
    %1133 = vmatpush2.bf16.msra.mxu0 0
    %1134 = vmatprep.subr.bf16.mxu0 0
    %1135 = vmatpush2.bf16.msra.mxu0 0
    %1136 = vmatprep.subr.bf16.mxu0 0
    %1137 = vmatpush2.bf16.msra.mxu0 0
    %1138 = vmatprep.subr.bf16.mxu0 0
    %1139 = vmatpush2.bf16.msra.mxu0 0
    %1140 = vmatprep.subr.bf16.mxu0 0
    %1141 = vmatpush2.bf16.msra.mxu0 0
    %1142 = vmatprep.subr.bf16.mxu0 0
    %1143 = vmatpush2.bf16.msra.mxu0 0
    %1144 = vmatprep.subr.bf16.mxu0 0
    %1145 = vmatpush2.bf16.msra.mxu0 0
    %1146 = vmatprep.mubr.bf16.mxu0 0
    %1147 = vmatmul.mubr.bf16.gmra.mxu0 %v1042
    %v1148 = vpop.f32.mrf.mxu0
    %v1149 = vadd.f32 %v1064, %v1148
    %v1150 = vpop.f32.mrf.mxu0
    %v1151 = vpop.f32.mrf.mxu0
    %v1152 = vpop.f32.mrf.mxu0
    %1153 = vdwg.mxu0
    %v1154 = vtanh.pop %v1149
    %v1155 = vpack.c.bf16 %v1154, %v1154
    %v1156 = vld [vmem:[#allocation11] sm:$0xf]
    %v1157 = vld [vmem:[#allocation11 + $0x4] sm:$0xf]
    %v1158 = vld [vmem:[#allocation11 + $0x8] sm:$0xf]
    %v1159 = vld [vmem:[#allocation11 + $0xc] sm:$0xf]
    %v1160 = vld [vmem:[#allocation11 + $0x10] sm:$0xf]
    %v1161 = vld [vmem:[#allocation11 + $0x14] sm:$0xf]
    %v1162 = vld [vmem:[#allocation11 + $0x18] sm:$0xf]
    %v1163 = vld [vmem:[#allocation11 + $0x1c] sm:$0xf]
    %v1164 = vld [vmem:[#allocation11 + $0x20] sm:$0xf]
    %v1165 = vld [vmem:[#allocation11 + $0x24] sm:$0xf]
    %v1166 = vld [vmem:[#allocation11 + $0x28] sm:$0xf]
    %v1167 = vld [vmem:[#allocation11 + $0x2c] sm:$0xf]
    %v1168 = vld [vmem:[#allocation11 + $0x30] sm:$0xf]
    %v1169 = vld [vmem:[#allocation11 + $0x34] sm:$0xf]
    %v1170 = vld [vmem:[#allocation11 + $0x38] sm:$0xf]
    %v1171 = vld [vmem:[#allocation11 + $0x3c] sm:$0xf]
    %v1172 = vld [vmem:[%s10] sm:$0x1]
    %v1174 = vlaneseq
    %v1175 = vshrl.u32 %v1174, 7
    %v1176 = vsub.s32 0, %v1175
    %v1177 = vrot.slane %v1172, %v1176
    %v1195 = vunpack.c.l.b16 %v1156
    %v1196 = vunpack.c.l.b16 %v1157
    %v1197 = vunpack.c.l.b16 %v1158
    %v1198 = vunpack.c.l.b16 %v1159
    %v1199 = vunpack.c.l.b16 %v1160
    %v1200 = vunpack.c.l.b16 %v1161
    %v1201 = vunpack.c.l.b16 %v1162
    %v1202 = vunpack.c.l.b16 %v1163
    %v1203 = vunpack.c.l.b16 %v1164
    %v1204 = vunpack.c.l.b16 %v1165
    %v1205 = vunpack.c.l.b16 %v1166
    %v1206 = vunpack.c.l.b16 %v1167
    %v1207 = vunpack.c.l.b16 %v1168
    %v1208 = vunpack.c.l.b16 %v1169
    %v1209 = vunpack.c.l.b16 %v1170
    %v1210 = vunpack.c.l.b16 %v1171
    %v1211 = vpack.c.b16 %v1196, %v1195
    %v1212 = vpack.c.b16 %v1198, %v1197
    %v1213 = vpack.c.b16 %v1200, %v1199
    %v1214 = vpack.c.b16 %v1202, %v1201
    %v1215 = vpack.c.b16 %v1204, %v1203
    %v1216 = vpack.c.b16 %v1206, %v1205
    %v1217 = vpack.c.b16 %v1208, %v1207
    %v1218 = vpack.c.b16 %v1210, %v1209
    %1227 = vmatprep.subr.bf16.mxu0 0
    %1228 = vmatpush1.bf16.msra.mxu0 %v1218
    %1229 = vmatprep.subr.bf16.mxu0 0
    %1230 = vmatpush1.bf16.msra.mxu0 %v1217
    %1231 = vmatprep.subr.bf16.mxu0 0
    %1232 = vmatpush1.bf16.msra.mxu0 %v1216
    %1233 = vmatprep.subr.bf16.mxu0 0
    %1234 = vmatpush1.bf16.msra.mxu0 %v1215
    %1235 = vmatprep.subr.bf16.mxu0 0
    %1236 = vmatpush1.bf16.msra.mxu0 %v1214
    %1237 = vmatprep.subr.bf16.mxu0 0
    %1238 = vmatpush1.bf16.msra.mxu0 %v1213
    %1239 = vmatprep.subr.bf16.mxu0 0
    %1240 = vmatpush1.bf16.msra.mxu0 %v1212
    %1241 = vmatprep.subr.bf16.mxu0 0
    %1242 = vmatpush1.bf16.msra.mxu0 %v1211
    %1243 = vmatprep.subr.bf16.mxu0 0
    %1244 = vmatpush2.bf16.msra.mxu0 0
    %1245 = vmatprep.subr.bf16.mxu0 0
    %1246 = vmatpush2.bf16.msra.mxu0 0
    %1247 = vmatprep.subr.bf16.mxu0 0
    %1248 = vmatpush2.bf16.msra.mxu0 0
    %1249 = vmatprep.subr.bf16.mxu0 0
    %1250 = vmatpush2.bf16.msra.mxu0 0
    %1251 = vmatprep.subr.bf16.mxu0 0
    %1252 = vmatpush2.bf16.msra.mxu0 0
    %1253 = vmatprep.subr.bf16.mxu0 0
    %1254 = vmatpush2.bf16.msra.mxu0 0
    %1255 = vmatprep.subr.bf16.mxu0 0
    %1256 = vmatpush2.bf16.msra.mxu0 0
    %1257 = vmatprep.subr.bf16.mxu0 0
    %1258 = vmatpush2.bf16.msra.mxu0 0
    %1259 = vmatprep.mubr.bf16.mxu0 0
    %1260 = vmatmul.mubr.bf16.gmra.mxu0 %v1155
    %v1261 = vpop.f32.mrf.mxu0
    %v1262 = vadd.f32 %v1177, %v1261
    %v1263 = vpop.f32.mrf.mxu0
    %v1264 = vpop.f32.mrf.mxu0
    %v1265 = vpop.f32.mrf.mxu0
    %1266 = vdwg.mxu0
    %1267 = vst [vmem:[#allocation13] sm:$0xff] %v1262
    // Predicated region
    $region70: #{tpu_custom_call.1} parent=1 // pred_check
      _
    $region71: #{tpu_custom_call.1} parent=1 // pred_check_branch
      %1269 = sbr.rel (0) target = $region73
    $region72: #{tpu_custom_call.1} parent=1 // pred_region
      %s1271 = ssub.s32 128, 128
      %1272 = vsyncadd [#allocation4], %s1271
      %s1274 = sshll.u32 [#allocation13], 4
      %s1275 = int_to_ptr.vmem [resolvable:$true] %s1274
      %1277 = dma.vmem_to_hbm [thread:$0]  %s1275, 128, %s11, [#allocation4]
    $region73: #{tpu_custom_call.1} parent=1 // pred_fallthru
      _
    // Predicated region
    $region74: #{tpu_custom_call.1} parent=1 // pred_check
      _
    $region75: #{tpu_custom_call.1} parent=1 // pred_check_branch
      %1279 = sbr.rel (0) target = $region77
    $region76: #{tpu_custom_call.1} parent=1 // pred_region
      %1280 = dma.done [#allocation4], 128
    $region77: #{tpu_custom_call.1} parent=1 // pred_fallthru
      _
    %1281 = vsyncpa [#allocation3], 1
    %1282 = vsyncpa [#allocation6], 1
    %1283 = vsyncpa [#allocation9], 1
    %1284 = vsyncpa [#allocation12], 1
    %1285 = vsyncpa [#allocation4], 1

</llo_original>
